<compile_context>
chip_gen: v5e
topology: v5e:2x2
jax: 0.10.0
libtpu: 0.0.40
codegen_flags: <defaults>
</compile_context>

<pallas_src>
import numpy as np
import jax
import jax.numpy as jnp
from jax import lax
from jax.experimental import pallas as pl
from jax.experimental.pallas import tpu as pltpu


_LANE = 128     # TPU lane width
_SUB = 8        # TPU sublane count


def _cdiv(a, b):
    return -(-a // b)


def _round_up(a, b):
    return _cdiv(a, b) * b


def _choose_tiles(N, tn_req):
    """Pick (rows_per_step, N_pad, grid).

    rows_per_step is a multiple of 128; (rows_per_step // 128) is a multiple
    of 8 whenever grid > 1 (so the x BlockSpec satisfies the (8,128) rule);
    grid is kept even when > 1 so v7x's two TensorCores stay balanced.
    """
    n_g = _cdiv(N, _LANE)                                  # 128-row groups
    req_g = max(_SUB, (max(tn_req, _LANE) // _LANE) // _SUB * _SUB)
    if n_g <= req_g:
        if n_g >= 2 * _SUB:
            grid = 2                                       # split for megacore
            g = _round_up(_cdiv(n_g, 2), _SUB)
        else:
            grid = 1
            g = n_g                                        # block == full array
    else:
        grid = _cdiv(n_g, req_g)
        if grid % 2:
            grid += 1                                      # even grid for v7x
        g = _round_up(_cdiv(n_g, grid), _SUB)
    return g * _LANE, g * _LANE * grid, grid


def distance_rbf_linear_fused(x, centers, gammas, weight, bias, *,
                              tn=16384, out_dtype=jnp.float32,
                              mxu_dtype=jnp.bfloat16, exp_dtype=jnp.float32,
                              unroll=2, return_transposed=False):
    """Fused multi-name RBF + Linear.

    Args:
      x:       arbitrary-shape float distances (flattened to N rows).
      centers: (C_total,) concatenated RBF centers of all names.
      gammas:  (C_total,) per-center gamma.
      weight:  (C_total, E) stacked linear weights (transposed nn.Linear).
      bias:    (E,) pre-summed bias over all names.
      tn:      requested rows per grid step (rounded to a 1024-row multiple).
      out_dtype:  f32 (exact) or bf16 (halves the dominant HBM writeback).
      mxu_dtype:  dtype fed to the MXU (bf16 default = single-pass matmul).
      exp_dtype:  dtype of the exp (keep f32 on v5e; bf16 ok on v6e/v7x).
      unroll:     partial unroll factor of the inner 128-row chunk loop.
      return_transposed: if True, return the lane-dense (E, N) result and
        skip the wrapper-side transpose.
    Returns:
      (N, E) array (or (E, N) if return_transposed).
    """
    x = jnp.reshape(x, (-1,)).astype(jnp.float32)
    N = int(x.shape[0])
    C = int(centers.shape[0])
    E = int(weight.shape[1])

    # --- pad the center axis to a full 128-lane MXU K tile -------------------
    C_pad = _round_up(C, _LANE)
    centers = centers.astype(jnp.float32)
    neg_gammas = -gammas.astype(jnp.float32)               # pre-negated gamma
    weight = weight.astype(jnp.float32)
    if C_pad != C:
        centers = jnp.pad(centers, (0, C_pad - C))
        neg_gammas = jnp.pad(neg_gammas, (0, C_pad - C), constant_values=-1.0)
        weight = jnp.pad(weight, ((0, C_pad - C), (0, 0)))  # zero rows kill padding

    c_col = centers.reshape(C_pad, 1)                      # centers along sublanes
    ng_col = neg_gammas.reshape(C_pad, 1)
    w_t = weight.T.astype(mxu_dtype)                       # (E, C_pad) MXU LHS
    b_col = bias.astype(jnp.float32).reshape(E, 1)

    # --- row tiling -----------------------------------------------------------
    tn_eff, N_pad, grid = _choose_tiles(N, int(tn))
    n_chunks = tn_eff // _LANE
    unroll_eff = max(1, min(int(unroll), n_chunks))
    if N_pad != N:
        x = jnp.pad(x, (0, N_pad - N))
    x_rows = x.reshape(N_pad // _LANE, _LANE)              # lane-dense x layout

    R = _LANE

    def kernel(x_ref, c_ref, ng_ref, wt_ref, b_ref, o_ref):
        # Hoist small replicated operands / lane-broadcasts out of the loop
        # (JAX does not CSE broadcast_in_dim inside loops).
        c_b = jnp.broadcast_to(c_ref[...], (C_pad, R))     # (C_pad, R)
        ng_b = jnp.broadcast_to(ng_ref[...], (C_pad, R))   # -gamma
        b_b = jnp.broadcast_to(b_ref[...], (E, R))         # bias
        w = wt_ref[...]                                    # (E, C_pad), mxu dtype

        def body(j, carry):
            xr = x_ref[pl.ds(j, 1), :]                     # (1, R): rows j*128..+127
            d = xr - c_b                                   # (C_pad, R)
            arg = ng_b * d * d                             # -gamma * (x - c)^2
            rbf = jnp.exp(arg.astype(exp_dtype)).astype(mxu_dtype)
            y = jnp.dot(w, rbf, preferred_element_type=jnp.float32) + b_b
            col = pl.multiple_of(j * R, R)
            o_ref[:, pl.ds(col, R)] = y.astype(o_ref.dtype)   # dense full-lane store
            return carry

        lax.fori_loop(0, n_chunks, body, None, unroll=unroll_eff)

    out_isz = jnp.dtype(out_dtype).itemsize
    mxu_isz = jnp.dtype(mxu_dtype).itemsize
    E_sub = _round_up(E, _SUB)
    # Double-buffered per-step VMEM footprint (with layout padding).
    step_bytes = 2 * (tn_eff * 4                            # x block
                      + E_sub * tn_eff * out_isz            # out block (lane-dense)
                      + 2 * C_pad * _LANE * 4               # centers + (-gamma) cols
                      + E_sub * C_pad * mxu_isz             # W^T
                      + E_sub * _LANE * 4)                  # bias col
    vmem_limit = int(min(64 * 1024 * 1024,
                         max(32 * 1024 * 1024, 2 * step_bytes)))

    cost = pl.CostEstimate(
        flops=2 * N_pad * C_pad * E,
        transcendentals=N_pad * C_pad,
        bytes_accessed=(N_pad * 4                           # x
                        + N_pad * E * out_isz               # out
                        + C_pad * E * mxu_isz               # weight
                        + 2 * C_pad * 4 + E * 4),           # centers, gammas, bias
    )

    out_t = pl.pallas_call(
        kernel,
        out_shape=jax.ShapeDtypeStruct((E, N_pad), out_dtype),
        grid_spec=pltpu.PrefetchScalarGridSpec(
            num_scalar_prefetch=0,
            grid=(grid,),
            in_specs=[
                pl.BlockSpec((tn_eff // _LANE, _LANE), lambda i: (i, 0)),  # x rows
                pl.BlockSpec((C_pad, 1), lambda i: (0, 0)),                # centers
                pl.BlockSpec((C_pad, 1), lambda i: (0, 0)),                # -gamma
                pl.BlockSpec((E, C_pad), lambda i: (0, 0)),                # W^T
                pl.BlockSpec((E, 1), lambda i: (0, 0)),                    # bias
            ],
            out_specs=pl.BlockSpec((E, tn_eff), lambda i: (0, i)),
        ),
        compiler_params=pltpu.CompilerParams(
            dimension_semantics=("parallel",),
            vmem_limit_bytes=vmem_limit,
        ),
        cost_estimate=cost,
    )(x_rows, c_col, ng_col, w_t, b_col)

    out_t = out_t[:, :N]
    if return_transposed:
        return out_t
    return out_t.T                                          # (N, E) module view


class DistanceFloatRBFJax:
    """JAX/Pallas re-implementation of DistanceFloatRBF (deterministic init)."""

    def __init__(self, distance_float_names, embed_dim, rbf_params=None,
                 seed=0, tn=16384, out_dtype=jnp.float32,
                 mxu_dtype=jnp.bfloat16, exp_dtype=jnp.float32):
        self.distance_float_names = list(distance_float_names)
        self.embed_dim = embed_dim
        self.tn = tn
        self.out_dtype = out_dtype
        self.mxu_dtype = mxu_dtype
        self.exp_dtype = exp_dtype
        if rbf_params is None:
            self.rbf_params = {"distance": (np.arange(0, 9.5, 0.1), 10.0)}
        else:
            self.rbf_params = rbf_params

        key = jax.random.PRNGKey(seed)
        self.per_name_params = []          # for the pure-JAX reference
        centers_cat, gammas_cat, weights_cat = [], [], []
        bias_sum = jnp.zeros((embed_dim,), jnp.float32)

        for name in self.distance_float_names:
            centers_np, gamma = self.rbf_params[name]
            centers = jnp.asarray(np.asarray(centers_np, dtype=np.float32))
            n_centers = centers.shape[0]
            key, kw, kb = jax.random.split(key, 3)
            bound = 1.0 / np.sqrt(n_centers)   # nn.Linear default init range
            w = jax.random.uniform(kw, (n_centers, embed_dim), jnp.float32,
                                   -bound, bound)
            b = jax.random.uniform(kb, (embed_dim,), jnp.float32, -bound, bound)

            self.per_name_params.append((centers, float(gamma), w, b))
            centers_cat.append(centers)
            gammas_cat.append(jnp.full((n_centers,), float(gamma), jnp.float32))
            weights_cat.append(w)
            bias_sum = bias_sum + b

        # Fused parameters: one exp + one matmul covers every name.
        self.centers_cat = jnp.concatenate(centers_cat, axis=0)
        self.gammas_cat = jnp.concatenate(gammas_cat, axis=0)
        self.weight_cat = jnp.concatenate(weights_cat, axis=0)
        self.bias_sum = bias_sum

    def __call__(self, distance_float_features):
        return distance_rbf_linear_fused(
            distance_float_features, self.centers_cat, self.gammas_cat,
            self.weight_cat, self.bias_sum, tn=self.tn,
            out_dtype=self.out_dtype, mxu_dtype=self.mxu_dtype,
            exp_dtype=self.exp_dtype)


def _reference(module, x):
    """Pure-JAX reference mirroring the original per-name torch loop."""
    xf = jnp.reshape(x, (-1, 1)).astype(jnp.float32)
    out = 0.0
    for centers, gamma, weight, bias in module.per_name_params:
        rbf = jnp.exp(-gamma * jnp.square(xf - centers[None, :]))
        out = out + rbf @ weight + bias[None, :]
    return out


if __name__ == "__main__":
    embed_dim = 32
    key = jax.random.PRNGKey(0)
    k1, k2 = jax.random.split(key)

    # Case 1: default single name (95 centers), N = 250 rows (not a tile
    # multiple -> exercises the pad-and-slice path).  Default = bf16 MXU.
    m1 = DistanceFloatRBFJax(["distance"], embed_dim, seed=0)
    x1 = jax.random.uniform(k1, (5, 50), jnp.float32, 0.0, 9.5)
    out1 = jax.block_until_ready(m1(x1))
    ref1 = _reference(m1, x1)
    assert out1.shape == (250, embed_dim), out1.shape
    err1 = float(jnp.max(jnp.abs(out1 - ref1)))
    assert err1 < 1e-2, err1            # bf16 MXU operands, f32 accumulate

    # Exact path: f32 MXU operands must match the reference tightly.
    out1_f32 = jax.block_until_ready(distance_rbf_linear_fused(
        x1, m1.centers_cat, m1.gammas_cat, m1.weight_cat, m1.bias_sum,
        mxu_dtype=jnp.float32))
    err1_f32 = float(jnp.max(jnp.abs(out1_f32 - ref1)))
    assert err1_f32 < 1e-3, err1_f32

    # Case 2: two distance-float names fused into a single kernel call.
    rbf_params = {
        "distance": (np.arange(0, 9.5, 0.1), 10.0),
        "distance2": (np.arange(0, 4.0, 0.25), 4.0),
    }
    m2 = DistanceFloatRBFJax(["distance", "distance2"], embed_dim,
                             rbf_params=rbf_params, seed=1)
    x2 = jax.random.uniform(k2, (2, 128), jnp.float32, 0.0, 9.5)
    out2 = jax.block_until_ready(m2(x2))
    ref2 = _reference(m2, x2)
    assert out2.shape == (256, embed_dim), out2.shape
    err2 = float(jnp.max(jnp.abs(out2 - ref2)))
    assert err2 < 2e-2, err2            # bf16 MXU, two fused names

    out2_f32 = jax.block_until_ready(distance_rbf_linear_fused(
        x2, m2.centers_cat, m2.gammas_cat, m2.weight_cat, m2.bias_sum,
        mxu_dtype=jnp.float32))
    err2_f32 = float(jnp.max(jnp.abs(out2_f32 - ref2)))
    assert err2_f32 < 1e-3, err2_f32

    print("KERNEL_OK")
</pallas_src>

<mosaic_0001>
module attributes {stable_mosaic.version = 11 : i64} {
  func.func @kernel(%arg0: i32, %arg1: memref<2x128xf32, #tpu.memory_space<vmem>>, %arg2: memref<128x1xf32, #tpu.memory_space<vmem>>, %arg3: memref<128x1xf32, #tpu.memory_space<vmem>>, %arg4: memref<32x128xbf16, #tpu.memory_space<vmem>>, %arg5: memref<32x1xf32, #tpu.memory_space<vmem>>, %arg6: memref<32x256xf32, #tpu.memory_space<vmem>>) attributes {dimension_semantics = [#tpu.dimension_semantics<parallel>], iteration_bounds = array<i64: 1>, scalar_prefetch = 0 : i64, scratch_operands = 0 : i64, tpu.core_type = #tpu.core_type<tc>, window_params = [{transform_indices = @transform_0, window_bounds = array<i64: 2, 128>}, {pipeline_mode = #tpu.pipeline_mode<synchronous>, transform_indices = @transform_1, window_bounds = array<i64: 128, 1>}, {pipeline_mode = #tpu.pipeline_mode<synchronous>, transform_indices = @transform_2, window_bounds = array<i64: 128, 1>}, {pipeline_mode = #tpu.pipeline_mode<synchronous>, transform_indices = @transform_3, window_bounds = array<i64: 32, 128>}, {pipeline_mode = #tpu.pipeline_mode<synchronous>, transform_indices = @transform_4, window_bounds = array<i64: 32, 1>}, {transform_indices = @transform_5, window_bounds = array<i64: 32, 256>}]} {
    %c0 = arith.constant 0 : index
    %c0_0 = arith.constant 0 : index
    %0 = vector.load %arg2[%c0, %c0_0] : memref<128x1xf32, #tpu.memory_space<vmem>>, vector<128x1xf32>
    %1 = vector.shape_cast %0 : vector<128x1xf32> to vector<128x1xf32>
    %2 = vector.broadcast %1 : vector<128x1xf32> to vector<128x128xf32>
    %c0_1 = arith.constant 0 : index
    %c0_2 = arith.constant 0 : index
    %3 = vector.load %arg3[%c0_1, %c0_2] : memref<128x1xf32, #tpu.memory_space<vmem>>, vector<128x1xf32>
    %4 = vector.shape_cast %3 : vector<128x1xf32> to vector<128x1xf32>
    %5 = vector.broadcast %4 : vector<128x1xf32> to vector<128x128xf32>
    %c0_3 = arith.constant 0 : index
    %c0_4 = arith.constant 0 : index
    %6 = vector.load %arg5[%c0_3, %c0_4] : memref<32x1xf32, #tpu.memory_space<vmem>>, vector<32x1xf32>
    %7 = vector.shape_cast %6 : vector<32x1xf32> to vector<32x1xf32>
    %8 = vector.broadcast %7 : vector<32x1xf32> to vector<32x128xf32>
    %c0_5 = arith.constant 0 : index
    %c0_6 = arith.constant 0 : index
    %9 = vector.load %arg4[%c0_5, %c0_6] : memref<32x128xbf16, #tpu.memory_space<vmem>>, vector<32x128xbf16>
    %c0_i32 = arith.constant 0 : i32
    %10 = arith.index_cast %c0_i32 : i32 to index
    %c0_7 = arith.constant 0 : index
    %11 = vector.load %arg1[%10, %c0_7] : memref<2x128xf32, #tpu.memory_space<vmem>>, vector<1x128xf32>
    %12 = vector.broadcast %11 : vector<1x128xf32> to vector<128x128xf32>
    %13 = arith.subf %12, %2 : vector<128x128xf32>
    %14 = arith.mulf %5, %13 : vector<128x128xf32>
    %15 = arith.mulf %14, %13 : vector<128x128xf32>
    %16 = math.exp %15 : vector<128x128xf32>
    %17 = arith.truncf %16 : vector<128x128xf32> to vector<128x128xbf16>
    %cst = arith.constant dense<0.000000e+00> : vector<32x128xf32>
    %18 = tpu.matmul %9, %17, %cst {dimension_numbers = #tpu.dot_dimension_numbers<[1], [0], [0], [1], [0, 0, 1, 1], [], []>} : vector<32x128xbf16>, vector<128x128xbf16>, vector<32x128xf32> -> vector<32x128xf32>
    %19 = arith.addf %18, %8 : vector<32x128xf32>
    %c128_i32 = arith.constant 128 : i32
    %20 = arith.muli %c0_i32, %c128_i32 : i32
    %21 = tpu.assume_multiple %20, 128 : i32
    %c0_8 = arith.constant 0 : index
    %22 = arith.index_cast %21 : i32 to index
    %23 = vector.load %arg6[%c0_8, %22] : memref<32x256xf32, #tpu.memory_space<vmem>>, vector<32x128xf32>
    tpu.vector_store %arg6[%c0_8, %22], %19 {strides = array<i32>} : memref<32x256xf32, #tpu.memory_space<vmem>>, vector<32x128xf32>,
    %c1_i32 = arith.constant 1 : i32
    %24 = arith.index_cast %c1_i32 : i32 to index
    %c0_9 = arith.constant 0 : index
    %25 = vector.load %arg1[%24, %c0_9] : memref<2x128xf32, #tpu.memory_space<vmem>>, vector<1x128xf32>
    %26 = vector.broadcast %25 : vector<1x128xf32> to vector<128x128xf32>
    %27 = arith.subf %26, %2 : vector<128x128xf32>
    %28 = arith.mulf %5, %27 : vector<128x128xf32>
    %29 = arith.mulf %28, %27 : vector<128x128xf32>
    %30 = math.exp %29 : vector<128x128xf32>
    %31 = arith.truncf %30 : vector<128x128xf32> to vector<128x128xbf16>
    %cst_10 = arith.constant dense<0.000000e+00> : vector<32x128xf32>
    %32 = tpu.matmul %9, %31, %cst_10 {dimension_numbers = #tpu.dot_dimension_numbers<[1], [0], [0], [1], [0, 0, 1, 1], [], []>} : vector<32x128xbf16>, vector<128x128xbf16>, vector<32x128xf32> -> vector<32x128xf32>
    %33 = arith.addf %32, %8 : vector<32x128xf32>
    %c128_i32_11 = arith.constant 128 : i32
    %34 = arith.muli %c1_i32, %c128_i32_11 : i32
    %35 = tpu.assume_multiple %34, 128 : i32
    %c0_12 = arith.constant 0 : index
    %36 = arith.index_cast %35 : i32 to index
    %37 = vector.load %arg6[%c0_12, %36] : memref<32x256xf32, #tpu.memory_space<vmem>>, vector<32x128xf32>
    tpu.vector_store %arg6[%c0_12, %36], %33 {strides = array<i32>} : memref<32x256xf32, #tpu.memory_space<vmem>>, vector<32x128xf32>,
    %c2_i32 = arith.constant 2 : i32
    return
  }
  func.func @transform_0(%arg0: i32) -> (i32, i32) {
    %c0_i32 = arith.constant 0 : i32
    %c0_i32_0 = arith.constant 0 : i32
    return %arg0, %c0_i32 : i32, i32
  }
  func.func @transform_1(%arg0: i32) -> (i32, i32) {
    %c0_i32 = arith.constant 0 : i32
    %c0_i32_0 = arith.constant 0 : i32
    %c0_i32_1 = arith.constant 0 : i32
    return %c0_i32, %c0_i32_0 : i32, i32
  }
  func.func @transform_2(%arg0: i32) -> (i32, i32) {
    %c0_i32 = arith.constant 0 : i32
    %c0_i32_0 = arith.constant 0 : i32
    %c0_i32_1 = arith.constant 0 : i32
    return %c0_i32, %c0_i32_0 : i32, i32
  }
  func.func @transform_3(%arg0: i32) -> (i32, i32) {
    %c0_i32 = arith.constant 0 : i32
    %c0_i32_0 = arith.constant 0 : i32
    %c0_i32_1 = arith.constant 0 : i32
    return %c0_i32, %c0_i32_0 : i32, i32
  }
  func.func @transform_4(%arg0: i32) -> (i32, i32) {
    %c0_i32 = arith.constant 0 : i32
    %c0_i32_0 = arith.constant 0 : i32
    %c0_i32_1 = arith.constant 0 : i32
    return %c0_i32, %c0_i32_0 : i32, i32
  }
  func.func @transform_5(%arg0: i32) -> (i32, i32) {
    %c0_i32 = arith.constant 0 : i32
    %c0_i32_0 = arith.constant 0 : i32
    return %c0_i32, %arg0 : i32, i32
  }
}

</mosaic_0001>

<llo_original>
// kernel: tpu_custom_call.1
$region0: #{tpu_custom_call.1}
  #allocation0 [shape = 'u32[]', space=smem, size = 0x4, offset = 0x4, fixed_abs, tag = 'smem constant byte address 0x4 - core index']
  #allocation1 [shape = 'u32[72,128]{1,0:T(1,128)}', space=vmem, size = 0x9000, scoped, tag = 'internal scratch']
  %s0 = inlined_call_operand.vmem [shape: f32[2,128], index: 0, kind: input, shape index: {}]
  %s1 = inlined_call_operand.vmem [shape: f32[128,1], index: 1, kind: input, shape index: {}]
  %s2 = inlined_call_operand.vmem [shape: f32[128,1], index: 2, kind: input, shape index: {}]
  %s3 = inlined_call_operand.vmem [shape: bf16[32,128], index: 3, kind: input, shape index: {}]
  %s4 = inlined_call_operand.vmem [shape: f32[32,1], index: 4, kind: input, shape index: {}]
  %s5 = inlined_call_operand.hbm [shape: f32[32,256], index: 5, kind: output, shape index: {}]
  %s6 = sld [smem:[#allocation0]]
  $region30: #{tpu_custom_call.1} parent=0
    _
  %s8 = ssub.s32 1, %s6
  %s9 = scalar_select 0, %s8, %s6
  $region1: #{tpu_custom_call.1} parent=0
    #allocation2 [shape = 'u8[32768]{0}', space=vmem, size = 0x8000, scoped, tag = 'output window, operand 0, single buffered']
    #allocation3 [shape = 's32[1]{0}', space=sflag, size = 0x4, scoped, tag = 'scoped memory for tpu_custom_call.1']
    %10 = vsyncpa [#allocation3], 0
    // Predicated region
    $region2: #{tpu_custom_call.1} parent=1 // pred_check
      _
    $region3: #{tpu_custom_call.1} parent=1 // pred_check_branch
      %12 = sbr.rel (0) target = $region5
    $region4: #{tpu_custom_call.1} parent=1 // pred_region
      _
    $region5: #{tpu_custom_call.1} parent=1 // pred_fallthru
      _
    // Predicated region
    $region6: #{tpu_custom_call.1} parent=1 // pred_check
      _
    $region7: #{tpu_custom_call.1} parent=1 // pred_check_branch
      %14 = sbr.rel (0) target = $region9
    $region8: #{tpu_custom_call.1} parent=1 // pred_region
      _
    $region9: #{tpu_custom_call.1} parent=1 // pred_fallthru
      _
    // Predicated region
    $region10: #{tpu_custom_call.1} parent=1 // pred_check
      _
    $region11: #{tpu_custom_call.1} parent=1 // pred_check_branch
      %16 = sbr.rel (0) target = $region13
    $region12: #{tpu_custom_call.1} parent=1 // pred_region
      _
    $region13: #{tpu_custom_call.1} parent=1 // pred_fallthru
      _
    // Predicated region
    $region14: #{tpu_custom_call.1} parent=1 // pred_check
      _
    $region15: #{tpu_custom_call.1} parent=1 // pred_check_branch
      %18 = sbr.rel (0) target = $region17
    $region16: #{tpu_custom_call.1} parent=1 // pred_region
      _
    $region17: #{tpu_custom_call.1} parent=1 // pred_fallthru
      _
    // Predicated region
    $region18: #{tpu_custom_call.1} parent=1 // pred_check
      _
    $region19: #{tpu_custom_call.1} parent=1 // pred_check_branch
      %20 = sbr.rel (0) target = $region21
    $region20: #{tpu_custom_call.1} parent=1 // pred_region
      _
    $region21: #{tpu_custom_call.1} parent=1 // pred_fallthru
      _
    %v21 = vld [vmem:[%s1] sm:$0xff]
    %v22 = vld [vmem:[%s1 + $0x8] sm:$0xff]
    %v23 = vld [vmem:[%s1 + $0x10] sm:$0xff]
    %v24 = vld [vmem:[%s1 + $0x18] sm:$0xff]
    %v25 = vld [vmem:[%s1 + $0x20] sm:$0xff]
    %v26 = vld [vmem:[%s1 + $0x28] sm:$0xff]
    %v27 = vld [vmem:[%s1 + $0x30] sm:$0xff]
    %v28 = vld [vmem:[%s1 + $0x38] sm:$0xff]
    %v29 = vld [vmem:[%s1 + $0x40] sm:$0xff]
    %v30 = vld [vmem:[%s1 + $0x48] sm:$0xff]
    %v31 = vld [vmem:[%s1 + $0x50] sm:$0xff]
    %v32 = vld [vmem:[%s1 + $0x58] sm:$0xff]
    %v33 = vld [vmem:[%s1 + $0x60] sm:$0xff]
    %v34 = vld [vmem:[%s1 + $0x68] sm:$0xff]
    %v35 = vld [vmem:[%s1 + $0x70] sm:$0xff]
    %v36 = vld [vmem:[%s1 + $0x78] sm:$0xff]
    %38 = vset.pattern.permute.xlu0 0
    %39 = vperm.xlu0 %38, %v21
    %v40 = vpop.permute.xlu0 %39
    %43 = vset.pattern.permute.xlu0 0
    %44 = vperm.xlu0 %43, %v22
    %v45 = vpop.permute.xlu0 %44
    %48 = vset.pattern.permute.xlu0 0
    %49 = vperm.xlu0 %48, %v23
    %v50 = vpop.permute.xlu0 %49
    %53 = vset.pattern.permute.xlu0 0
    %54 = vperm.xlu0 %53, %v24
    %v55 = vpop.permute.xlu0 %54
    %58 = vset.pattern.permute.xlu0 0
    %59 = vperm.xlu0 %58, %v25
    %v60 = vpop.permute.xlu0 %59
    %63 = vset.pattern.permute.xlu0 0
    %64 = vperm.xlu0 %63, %v26
    %v65 = vpop.permute.xlu0 %64
    %68 = vset.pattern.permute.xlu0 0
    %69 = vperm.xlu0 %68, %v27
    %v70 = vpop.permute.xlu0 %69
    %73 = vset.pattern.permute.xlu0 0
    %74 = vperm.xlu0 %73, %v28
    %v75 = vpop.permute.xlu0 %74
    %78 = vset.pattern.permute.xlu0 0
    %79 = vperm.xlu0 %78, %v29
    %v80 = vpop.permute.xlu0 %79
    %83 = vset.pattern.permute.xlu0 0
    %84 = vperm.xlu0 %83, %v30
    %v85 = vpop.permute.xlu0 %84
    %88 = vset.pattern.permute.xlu0 0
    %89 = vperm.xlu0 %88, %v31
    %v90 = vpop.permute.xlu0 %89
    %93 = vset.pattern.permute.xlu0 0
    %94 = vperm.xlu0 %93, %v32
    %v95 = vpop.permute.xlu0 %94
    %98 = vset.pattern.permute.xlu0 0
    %99 = vperm.xlu0 %98, %v33
    %v100 = vpop.permute.xlu0 %99
    %103 = vset.pattern.permute.xlu0 0
    %104 = vperm.xlu0 %103, %v34
    %v105 = vpop.permute.xlu0 %104
    %108 = vset.pattern.permute.xlu0 0
    %109 = vperm.xlu0 %108, %v35
    %v110 = vpop.permute.xlu0 %109
    %113 = vset.pattern.permute.xlu0 0
    %114 = vperm.xlu0 %113, %v36
    %v115 = vpop.permute.xlu0 %114
    %v117 = vld [vmem:[%s2] sm:$0xff]
    %v118 = vld [vmem:[%s2 + $0x8] sm:$0xff]
    %v119 = vld [vmem:[%s2 + $0x10] sm:$0xff]
    %v120 = vld [vmem:[%s2 + $0x18] sm:$0xff]
    %v121 = vld [vmem:[%s2 + $0x20] sm:$0xff]
    %v122 = vld [vmem:[%s2 + $0x28] sm:$0xff]
    %v123 = vld [vmem:[%s2 + $0x30] sm:$0xff]
    %v124 = vld [vmem:[%s2 + $0x38] sm:$0xff]
    %v125 = vld [vmem:[%s2 + $0x40] sm:$0xff]
    %v126 = vld [vmem:[%s2 + $0x48] sm:$0xff]
    %v127 = vld [vmem:[%s2 + $0x50] sm:$0xff]
    %v128 = vld [vmem:[%s2 + $0x58] sm:$0xff]
    %v129 = vld [vmem:[%s2 + $0x60] sm:$0xff]
    %v130 = vld [vmem:[%s2 + $0x68] sm:$0xff]
    %v131 = vld [vmem:[%s2 + $0x70] sm:$0xff]
    %v132 = vld [vmem:[%s2 + $0x78] sm:$0xff]
    %134 = vset.pattern.permute.xlu0 0
    %135 = vperm.xlu0 %134, %v117
    %v136 = vpop.permute.xlu0 %135
    %139 = vset.pattern.permute.xlu0 0
    %140 = vperm.xlu0 %139, %v118
    %v141 = vpop.permute.xlu0 %140
    %144 = vset.pattern.permute.xlu0 0
    %145 = vperm.xlu0 %144, %v119
    %v146 = vpop.permute.xlu0 %145
    %149 = vset.pattern.permute.xlu0 0
    %150 = vperm.xlu0 %149, %v120
    %v151 = vpop.permute.xlu0 %150
    %154 = vset.pattern.permute.xlu0 0
    %155 = vperm.xlu0 %154, %v121
    %v156 = vpop.permute.xlu0 %155
    %159 = vset.pattern.permute.xlu0 0
    %160 = vperm.xlu0 %159, %v122
    %v161 = vpop.permute.xlu0 %160
    %164 = vset.pattern.permute.xlu0 0
    %165 = vperm.xlu0 %164, %v123
    %v166 = vpop.permute.xlu0 %165
    %169 = vset.pattern.permute.xlu0 0
    %170 = vperm.xlu0 %169, %v124
    %v171 = vpop.permute.xlu0 %170
    %174 = vset.pattern.permute.xlu0 0
    %175 = vperm.xlu0 %174, %v125
    %v176 = vpop.permute.xlu0 %175
    %179 = vset.pattern.permute.xlu0 0
    %180 = vperm.xlu0 %179, %v126
    %v181 = vpop.permute.xlu0 %180
    %184 = vset.pattern.permute.xlu0 0
    %185 = vperm.xlu0 %184, %v127
    %v186 = vpop.permute.xlu0 %185
    %189 = vset.pattern.permute.xlu0 0
    %190 = vperm.xlu0 %189, %v128
    %v191 = vpop.permute.xlu0 %190
    %194 = vset.pattern.permute.xlu0 0
    %195 = vperm.xlu0 %194, %v129
    %v196 = vpop.permute.xlu0 %195
    %199 = vset.pattern.permute.xlu0 0
    %200 = vperm.xlu0 %199, %v130
    %v201 = vpop.permute.xlu0 %200
    %204 = vset.pattern.permute.xlu0 0
    %205 = vperm.xlu0 %204, %v131
    %v206 = vpop.permute.xlu0 %205
    %209 = vset.pattern.permute.xlu0 0
    %210 = vperm.xlu0 %209, %v132
    %v211 = vpop.permute.xlu0 %210
    %v213 = vld [vmem:[%s4] sm:$0xff]
    %v214 = vld [vmem:[%s4 + $0x8] sm:$0xff]
    %v215 = vld [vmem:[%s4 + $0x10] sm:$0xff]
    %v216 = vld [vmem:[%s4 + $0x18] sm:$0xff]
    %218 = vset.pattern.permute.xlu0 0
    %219 = vperm.xlu0 %218, %v213
    %v220 = vpop.permute.xlu0 %219
    %223 = vset.pattern.permute.xlu0 0
    %224 = vperm.xlu0 %223, %v214
    %v225 = vpop.permute.xlu0 %224
    %228 = vset.pattern.permute.xlu0 0
    %229 = vperm.xlu0 %228, %v215
    %v230 = vpop.permute.xlu0 %229
    %233 = vset.pattern.permute.xlu0 0
    %234 = vperm.xlu0 %233, %v216
    %v235 = vpop.permute.xlu0 %234
    %v237 = vld [vmem:[%s3] sm:$0xf]
    %v238 = vld [vmem:[%s3 + $0x4] sm:$0xf]
    %v239 = vld [vmem:[%s3 + $0x8] sm:$0xf]
    %v240 = vld [vmem:[%s3 + $0xc] sm:$0xf]
    %v241 = vld [vmem:[%s0] sm:$0x1]
    %v242 = vperm.slane %v241, 0
    %v243 = vsub.f32 %v242, %v40
    %v244 = vsub.f32 %v242, %v45
    %v245 = vsub.f32 %v242, %v50
    %v246 = vsub.f32 %v242, %v55
    %v247 = vsub.f32 %v242, %v60
    %v248 = vsub.f32 %v242, %v65
    %v249 = vsub.f32 %v242, %v70
    %v250 = vsub.f32 %v242, %v75
    %v251 = vsub.f32 %v242, %v80
    %v252 = vsub.f32 %v242, %v85
    %v253 = vsub.f32 %v242, %v90
    %v254 = vsub.f32 %v242, %v95
    %v255 = vsub.f32 %v242, %v100
    %v256 = vsub.f32 %v242, %v105
    %v257 = vsub.f32 %v242, %v110
    %v258 = vsub.f32 %v242, %v115
    %v259 = vmul.f32 %v136, %v243
    %v260 = vmul.f32 %v141, %v244
    %v261 = vmul.f32 %v146, %v245
    %v262 = vmul.f32 %v151, %v246
    %v263 = vmul.f32 %v156, %v247
    %v264 = vmul.f32 %v161, %v248
    %v265 = vmul.f32 %v166, %v249
    %v266 = vmul.f32 %v171, %v250
    %v267 = vmul.f32 %v176, %v251
    %v268 = vmul.f32 %v181, %v252
    %v269 = vmul.f32 %v186, %v253
    %v270 = vmul.f32 %v191, %v254
    %v271 = vmul.f32 %v196, %v255
    %v272 = vmul.f32 %v201, %v256
    %v273 = vmul.f32 %v206, %v257
    %v274 = vmul.f32 %v211, %v258
    %v275 = vmul.f32 %v259, %v243
    %v276 = vmul.f32 %v260, %v244
    %v277 = vmul.f32 %v261, %v245
    %v278 = vmul.f32 %v262, %v246
    %v279 = vmul.f32 %v263, %v247
    %v280 = vmul.f32 %v264, %v248
    %v281 = vmul.f32 %v265, %v249
    %v282 = vmul.f32 %v266, %v250
    %v283 = vmul.f32 %v267, %v251
    %v284 = vmul.f32 %v268, %v252
    %v285 = vmul.f32 %v269, %v253
    %v286 = vmul.f32 %v270, %v254
    %v287 = vmul.f32 %v271, %v255
    %v288 = vmul.f32 %v272, %v256
    %v289 = vmul.f32 %v273, %v257
    %v290 = vmul.f32 %v274, %v258
    %v291 = vmul.f32 %v275, 1.442695
    %v292 = vpow.pop %v291
    %v293 = vmul.f32 %v276, 1.442695
    %v294 = vpow.pop %v293
    %v295 = vmul.f32 %v277, 1.442695
    %v296 = vpow.pop %v295
    %v297 = vmul.f32 %v278, 1.442695
    %v298 = vpow.pop %v297
    %v299 = vmul.f32 %v279, 1.442695
    %v300 = vpow.pop %v299
    %v301 = vmul.f32 %v280, 1.442695
    %v302 = vpow.pop %v301
    %v303 = vmul.f32 %v281, 1.442695
    %v304 = vpow.pop %v303
    %v305 = vmul.f32 %v282, 1.442695
    %v306 = vpow.pop %v305
    %v307 = vmul.f32 %v283, 1.442695
    %v308 = vpow.pop %v307
    %v309 = vmul.f32 %v284, 1.442695
    %v310 = vpow.pop %v309
    %v311 = vmul.f32 %v285, 1.442695
    %v312 = vpow.pop %v311
    %v313 = vmul.f32 %v286, 1.442695
    %v314 = vpow.pop %v313
    %v315 = vmul.f32 %v287, 1.442695
    %v316 = vpow.pop %v315
    %v317 = vmul.f32 %v288, 1.442695
    %v318 = vpow.pop %v317
    %v319 = vmul.f32 %v289, 1.442695
    %v320 = vpow.pop %v319
    %v321 = vmul.f32 %v290, 1.442695
    %v322 = vpow.pop %v321
    %v323 = vpack.c.bf16 %v294, %v292
    %v324 = vpack.c.bf16 %v298, %v296
    %v325 = vpack.c.bf16 %v302, %v300
    %v326 = vpack.c.bf16 %v306, %v304
    %v327 = vpack.c.bf16 %v310, %v308
    %v328 = vpack.c.bf16 %v314, %v312
    %v329 = vpack.c.bf16 %v318, %v316
    %v330 = vpack.c.bf16 %v322, %v320
    %v335 = vunpack.c.l.b16 %v237
    %v336 = vunpack.c.l.b16 %v238
    %v337 = vunpack.c.l.b16 %v239
    %v338 = vunpack.c.l.b16 %v240
    %v339 = vpack.c.b16 %v336, %v335
    %v340 = vpack.c.b16 %v338, %v337
    %343 = vmatpush.bf16.msra.mxu0 %v330
    %344 = vmatpush.bf16.msra.mxu0 %v329
    %345 = vmatpush.bf16.msra.mxu0 %v328
    %346 = vmatpush.bf16.msra.mxu0 %v327
    %347 = vmatpush.bf16.msra.mxu0 %v326
    %348 = vmatpush.bf16.msra.mxu0 %v325
    %349 = vmatpush.bf16.msra.mxu0 %v324
    %350 = vmatpush.bf16.msra.mxu0 %v323
    %351 = vmatmul.bf16.gmra.mxu0 %v339
    %v352 = vpop.f32.mrf.mxu0
    %v353 = vadd.f32 %v220, %v352
    %v354 = vpop.f32.mrf.mxu0
    %v355 = vadd.f32 %v225, %v354
    %356 = vmatmul.bf16.gmra.mxu0 %v340
    %v357 = vpop.f32.mrf.mxu0
    %v358 = vadd.f32 %v230, %v357
    %v359 = vpop.f32.mrf.mxu0
    %v360 = vadd.f32 %v235, %v359
    %361 = vdwg.mxu0
    %362 = vst [vmem:[#allocation2] sm:$0xff] %v353
    %363 = vst [vmem:[#allocation2 + $0x10] sm:$0xff] %v355
    %364 = vst [vmem:[#allocation2 + $0x20] sm:$0xff] %v358
    %365 = vst [vmem:[#allocation2 + $0x30] sm:$0xff] %v360
    %v366 = vld [vmem:[%s0 + $0x1] sm:$0x1]
    %v367 = vperm.slane %v366, 0
    %v368 = vsub.f32 %v367, %v40
    %v369 = vsub.f32 %v367, %v45
    %v370 = vsub.f32 %v367, %v50
    %v371 = vsub.f32 %v367, %v55
    %v372 = vsub.f32 %v367, %v60
    %v373 = vsub.f32 %v367, %v65
    %v374 = vsub.f32 %v367, %v70
    %v375 = vsub.f32 %v367, %v75
    %v376 = vsub.f32 %v367, %v80
    %v377 = vsub.f32 %v367, %v85
    %v378 = vsub.f32 %v367, %v90
    %v379 = vsub.f32 %v367, %v95
    %v380 = vsub.f32 %v367, %v100
    %v381 = vsub.f32 %v367, %v105
    %v382 = vsub.f32 %v367, %v110
    %v383 = vsub.f32 %v367, %v115
    %v384 = vmul.f32 %v136, %v368
    %v385 = vmul.f32 %v141, %v369
    %v386 = vmul.f32 %v146, %v370
    %v387 = vmul.f32 %v151, %v371
    %v388 = vmul.f32 %v156, %v372
    %v389 = vmul.f32 %v161, %v373
    %v390 = vmul.f32 %v166, %v374
    %v391 = vmul.f32 %v171, %v375
    %v392 = vmul.f32 %v176, %v376
    %v393 = vmul.f32 %v181, %v377
    %v394 = vmul.f32 %v186, %v378
    %v395 = vmul.f32 %v191, %v379
    %v396 = vmul.f32 %v196, %v380
    %v397 = vmul.f32 %v201, %v381
    %v398 = vmul.f32 %v206, %v382
    %v399 = vmul.f32 %v211, %v383
    %v400 = vmul.f32 %v384, %v368
    %v401 = vmul.f32 %v385, %v369
    %v402 = vmul.f32 %v386, %v370
    %v403 = vmul.f32 %v387, %v371
    %v404 = vmul.f32 %v388, %v372
    %v405 = vmul.f32 %v389, %v373
    %v406 = vmul.f32 %v390, %v374
    %v407 = vmul.f32 %v391, %v375
    %v408 = vmul.f32 %v392, %v376
    %v409 = vmul.f32 %v393, %v377
    %v410 = vmul.f32 %v394, %v378
    %v411 = vmul.f32 %v395, %v379
    %v412 = vmul.f32 %v396, %v380
    %v413 = vmul.f32 %v397, %v381
    %v414 = vmul.f32 %v398, %v382
    %v415 = vmul.f32 %v399, %v383
    %v416 = vmul.f32 %v400, 1.442695
    %v417 = vpow.pop %v416
    %v418 = vmul.f32 %v401, 1.442695
    %v419 = vpow.pop %v418
    %v420 = vmul.f32 %v402, 1.442695
    %v421 = vpow.pop %v420
    %v422 = vmul.f32 %v403, 1.442695
    %v423 = vpow.pop %v422
    %v424 = vmul.f32 %v404, 1.442695
    %v425 = vpow.pop %v424
    %v426 = vmul.f32 %v405, 1.442695
    %v427 = vpow.pop %v426
    %v428 = vmul.f32 %v406, 1.442695
    %v429 = vpow.pop %v428
    %v430 = vmul.f32 %v407, 1.442695
    %v431 = vpow.pop %v430
    %v432 = vmul.f32 %v408, 1.442695
    %v433 = vpow.pop %v432
    %v434 = vmul.f32 %v409, 1.442695
    %v435 = vpow.pop %v434
    %v436 = vmul.f32 %v410, 1.442695
    %v437 = vpow.pop %v436
    %v438 = vmul.f32 %v411, 1.442695
    %v439 = vpow.pop %v438
    %v440 = vmul.f32 %v412, 1.442695
    %v441 = vpow.pop %v440
    %v442 = vmul.f32 %v413, 1.442695
    %v443 = vpow.pop %v442
    %v444 = vmul.f32 %v414, 1.442695
    %v445 = vpow.pop %v444
    %v446 = vmul.f32 %v415, 1.442695
    %v447 = vpow.pop %v446
    %v448 = vpack.c.bf16 %v419, %v417
    %v449 = vpack.c.bf16 %v423, %v421
    %v450 = vpack.c.bf16 %v427, %v425
    %v451 = vpack.c.bf16 %v431, %v429
    %v452 = vpack.c.bf16 %v435, %v433
    %v453 = vpack.c.bf16 %v439, %v437
    %v454 = vpack.c.bf16 %v443, %v441
    %v455 = vpack.c.bf16 %v447, %v445
    %456 = vmatpush.bf16.msra.mxu0 %v455
    %457 = vmatpush.bf16.msra.mxu0 %v454
    %458 = vmatpush.bf16.msra.mxu0 %v453
    %459 = vmatpush.bf16.msra.mxu0 %v452
    %460 = vmatpush.bf16.msra.mxu0 %v451
    %461 = vmatpush.bf16.msra.mxu0 %v450
    %462 = vmatpush.bf16.msra.mxu0 %v449
    %463 = vmatpush.bf16.msra.mxu0 %v448
    %464 = vmatmul.bf16.gmra.mxu0 %v339
    %v465 = vpop.f32.mrf.mxu0
    %v466 = vadd.f32 %v220, %v465
    %v467 = vpop.f32.mrf.mxu0
    %v468 = vadd.f32 %v225, %v467
    %469 = vmatmul.bf16.gmra.mxu0 %v340
    %v470 = vpop.f32.mrf.mxu0
    %v471 = vadd.f32 %v230, %v470
    %v472 = vpop.f32.mrf.mxu0
    %v473 = vadd.f32 %v235, %v472
    %474 = vdwg.mxu0
    %s475 = scalar_lea.vmem [#allocation2], 8
    %476 = vst [vmem:[%s475] sm:$0xff] %v466
    %477 = vst [vmem:[%s475 + $0x10] sm:$0xff] %v468
    %478 = vst [vmem:[%s475 + $0x20] sm:$0xff] %v471
    %479 = vst [vmem:[%s475 + $0x30] sm:$0xff] %v473
    // Predicated region
    $region22: #{tpu_custom_call.1} parent=1 // pred_check
      _
    $region23: #{tpu_custom_call.1} parent=1 // pred_check_branch
      %481 = sbr.rel (0) target = $region25
    $region24: #{tpu_custom_call.1} parent=1 // pred_region
      %483 = vsyncadd [#allocation3], 0
      %s484 = sshll.u32 [#allocation2], 4
      %s485 = int_to_ptr.vmem [resolvable:$true] %s484
      %s486 = sshll.u32 %s5, 4
      %s487 = int_to_ptr.hbm [resolvable:$true] %s486
      %492 = dma.vmem_to_hbm [thread:$0]  %s485, 1024, %s487, [#allocation3], 256, 256, 16
    $region25: #{tpu_custom_call.1} parent=1 // pred_fallthru
      _
    // Predicated region
    $region26: #{tpu_custom_call.1} parent=1 // pred_check
      _
    $region27: #{tpu_custom_call.1} parent=1 // pred_check_branch
      %494 = sbr.rel (0) target = $region29
    $region28: #{tpu_custom_call.1} parent=1 // pred_region
      %496 = dma.done [#allocation3], 1024
    $region29: #{tpu_custom_call.1} parent=1 // pred_fallthru
      _
    %497 = vsyncpa [#allocation3], 1

</llo_original>
